<compile_context>
chip_gen: v7x
topology: tpu7x:2x2x1
jax: 0.10.0
libtpu: 0.0.40
codegen_flags: <defaults>
</compile_context>

<pallas_src>
import math

import jax
import jax.numpy as jnp
from jax.experimental import pallas as pl
from jax.experimental.pallas import tpu as pltpu


MAX_TM = 256     # rows of activations per tile
MAX_TK = 2048    # single-tile reduction up to this K (GNMT hidden = 1024)
MAX_TN = 512     # output-lane tile; multiple of 256, v7x-VMEM-safe double-buffered


def _round_up(x, m):
    return (x + m - 1) // m * m


def _vmem_limit_bytes(tm, tk, tn, operand_bytes):
    # double-buffered x & w tiles + resident f32 output tile + bias, 2x headroom
    working = 2 * (tm * tk + tk * tn) * operand_bytes + 2 * tm * tn * 4 + 2 * tn * 4
    return int(min(64 * 1024 * 1024, max(32 * 1024 * 1024, 2 * working)))


# ----------------------------------------------------------------------------
# Kernels
# ----------------------------------------------------------------------------
def _linear_bias_kernel(x_ref, w_ref, b_ref, o_ref):
    # Single-K-tile fast path: one MXU pass + bias, direct store (no scratch).
    o_ref[...] = (
        jnp.dot(x_ref[...], w_ref[...], preferred_element_type=jnp.float32)
        + b_ref[...]
    )


def _linear_bias_ksplit_kernel(x_ref, w_ref, b_ref, o_ref):
    # K split over the last ("arbitrary") grid axis; accumulate directly into
    # the resident f32 output tile (output block index constant across k).
    part = jnp.dot(x_ref[...], w_ref[...], preferred_element_type=jnp.float32)
    k = pl.program_id(2)

    @pl.when(k == 0)
    def _():
        o_ref[...] = b_ref[...] + part

    @pl.when(k != 0)
    def _():
        o_ref[...] += part


# ----------------------------------------------------------------------------
# Parameter init: mirrors nn.Linear(in_features, linear_out); weight is stored
# ONCE, pre-transposed to [in, out], padded to tile-aligned shapes, bf16 default.
# ----------------------------------------------------------------------------
def init_classifier_params(key, in_features, out_features, math_mode="fp32",
                           dtype=jnp.bfloat16, max_tk=MAX_TK, max_tn=MAX_TN):
    linear_out = out_features
    if math_mode == "fp16":
        linear_out = (out_features + 7) // 8 * 8

    wk, bk = jax.random.split(key)
    bound = 1.0 / math.sqrt(in_features)
    w = jax.random.uniform(wk, (linear_out, in_features), jnp.float32, -bound, bound)
    b = jax.random.uniform(bk, (linear_out,), jnp.float32, -bound, bound)

    # K tiling: collapse the reduction to a single full-extent tile when it fits
    # (full-dim blocks bypass the lane/sublane divisibility rule -> no K pad).
    if in_features <= max_tk:
        tk, K_pad = in_features, in_features
    else:
        tk = max_tk
        K_pad = _round_up(in_features, tk)

    # N tiling: lane-dense multiple of 128, capped at max_tn (multiple of 256).
    n128 = _round_up(linear_out, 128)
    tn = n128 if n128 <= max_tn else max_tn
    N_pad = _round_up(linear_out, tn)

    w_t = jnp.zeros((K_pad, N_pad), jnp.float32)
    w_t = w_t.at[:in_features, :linear_out].set(w.T)
    w_t = w_t.astype(dtype)                       # single stored copy
    b_p = jnp.zeros((1, N_pad), jnp.float32).at[0, :linear_out].set(b)

    return {
        "w_t": w_t,                 # [K_pad, N_pad], pre-transposed + padded
        "b": b_p,                   # [1, N_pad], f32 (added after f32 accumulation)
        "in_features": in_features,
        "linear_out": linear_out,
        "out_features": out_features,
        "tk": tk,
        "tn": tn,
    }


# ----------------------------------------------------------------------------
# Forward: x[..., in_features] -> out[..., out_features]
# ----------------------------------------------------------------------------
def classifier_forward(params, x):
    w = params["w_t"]
    b = params["b"]
    K = params["in_features"]
    out_features = params["out_features"]
    tk, tn = params["tk"], params["tn"]
    K_pad, N_pad = w.shape
    assert x.shape[-1] == K, (x.shape, K)

    lead = x.shape[:-1]
    M = 1
    for d in lead:
        M *= d
    x2 = x.reshape(M, K).astype(w.dtype)          # cast BEFORE any padding

    tm = min(_round_up(max(M, 1), 16), MAX_TM)
    M_pad = _round_up(M, tm)
    if M_pad != M or K_pad != K:                  # pad only when actually needed
        x2 = jnp.pad(x2, ((0, M_pad - M), (0, K_pad - K)))

    n_n, n_m, n_k = N_pad // tn, M_pad // tm, K_pad // tk
    operand_bytes = jnp.dtype(w.dtype).itemsize
    vmem_limit = _vmem_limit_bytes(tm, tk, tn, operand_bytes)

    if n_k == 1:
        # N outer / M inner: weight tile constant across the inner M loop,
        # so the full weight is streamed exactly once per call.
        grid = (n_n, n_m)
        in_specs = [
            pl.BlockSpec((tm, tk), lambda j, i: (i, 0)),   # activation row panel
            pl.BlockSpec((tk, tn), lambda j, i: (0, j)),   # weight tile
            pl.BlockSpec((1, tn), lambda j, i: (0, j)),    # bias tile
        ]
        out_spec = pl.BlockSpec((tm, tn), lambda j, i: (i, j))
        kernel = _linear_bias_kernel
        semantics = ("parallel", "parallel")
    else:
        grid = (n_n, n_m, n_k)
        in_specs = [
            pl.BlockSpec((tm, tk), lambda j, i, k: (i, k)),
            pl.BlockSpec((tk, tn), lambda j, i, k: (k, j)),
            pl.BlockSpec((1, tn), lambda j, i, k: (0, j)),
        ]
        out_spec = pl.BlockSpec((tm, tn), lambda j, i, k: (i, j))
        kernel = _linear_bias_ksplit_kernel
        semantics = ("parallel", "parallel", "arbitrary")

    y = pl.pallas_call(
        kernel,
        out_shape=jax.ShapeDtypeStruct((M_pad, N_pad), jnp.float32),
        grid_spec=pltpu.PrefetchScalarGridSpec(
            num_scalar_prefetch=0,
            grid=grid,
            in_specs=in_specs,
            out_specs=out_spec,
        ),
        compiler_params=pltpu.CompilerParams(
            dimension_semantics=semantics,
            vmem_limit_bytes=vmem_limit,
        ),
    )(x2, w, b)

    # Drop row padding and slice [..., :out_features] (covers both lane padding
    # and the module's fp16-mode out_features padding).
    out = y[:M, :out_features]
    return out.reshape(*lead, out_features)


if __name__ == "__main__":
    key = jax.random.PRNGKey(0)

    # --- Test 1: GNMT-style Classifier, math='fp16' padding, bf16 weights ----
    in_features, out_features = 32, 50           # fp16 mode pads linear_out to 56
    seq, batch = 8, 2
    pkey, xkey, key = jax.random.split(key, 3)
    params = init_classifier_params(pkey, in_features, out_features, math_mode="fp16")
    x = jax.random.normal(xkey, (seq, batch, in_features), jnp.float32)

    y = classifier_forward(params, x)
    jax.block_until_ready(y)
    assert y.shape == (seq, batch, out_features), y.shape
    assert bool(jnp.all(jnp.isfinite(y)))

    # reference with the same (bf16) operands, f32 accumulation
    lin_out = params["linear_out"]
    w_ref = params["w_t"][:in_features, :lin_out].astype(jnp.float32)
    b_ref = params["b"][0, :lin_out]
    x_ref = x.reshape(-1, in_features).astype(params["w_t"].dtype).astype(jnp.float32)
    ref = (x_ref @ w_ref + b_ref)[:, :out_features].reshape(seq, batch, out_features)
    err1 = float(jnp.max(jnp.abs(y - ref)))
    assert bool(jnp.allclose(y, ref, atol=1e-2, rtol=1e-2)), err1

    # --- Test 2: fp32 weights, K split across grid, multi N tiles, padded M --
    in2, out2 = 256, 600
    pkey2, xkey2 = jax.random.split(key)
    params2 = init_classifier_params(pkey2, in2, out2, math_mode="fp32",
                                     dtype=jnp.float32, max_tk=128)
    x_b = jax.random.normal(xkey2, (5, 3, in2), jnp.float32)
    y2 = classifier_forward(params2, x_b)
    jax.block_until_ready(y2)
    assert y2.shape == (5, 3, out2), y2.shape
    assert bool(jnp.all(jnp.isfinite(y2)))

    w2_ref = params2["w_t"][:in2, :out2]
    b2_ref = params2["b"][0, :out2]
    ref2 = (x_b.reshape(-1, in2) @ w2_ref + b2_ref).reshape(5, 3, out2)
    err2 = float(jnp.max(jnp.abs(y2 - ref2)))
    assert bool(jnp.allclose(y2, ref2, atol=2e-2, rtol=2e-2)), err2

    print("KERNEL_OK")
</pallas_src>

<mosaic_0001>
module attributes {stable_mosaic.version = 11 : i64} {
  func.func @_linear_bias_kernel(%arg0: i32, %arg1: i32, %arg2: memref<16x32xbf16, #tpu.memory_space<vmem>>, %arg3: memref<32x128xbf16, #tpu.memory_space<vmem>>, %arg4: memref<1x128xf32, #tpu.memory_space<vmem>>, %arg5: memref<16x128xf32, #tpu.memory_space<vmem>>) attributes {dimension_semantics = [#tpu.dimension_semantics<parallel>, #tpu.dimension_semantics<parallel>], iteration_bounds = array<i64: 1, 1>, scalar_prefetch = 0 : i64, scratch_operands = 0 : i64, tpu.core_type = #tpu.core_type<tc>, window_params = [{transform_indices = @transform_0, window_bounds = array<i64: 16, 32>}, {transform_indices = @transform_1, window_bounds = array<i64: 32, 128>}, {transform_indices = @transform_2, window_bounds = array<i64: 1, 128>}, {transform_indices = @transform_3, window_bounds = array<i64: 16, 128>}]} {
    %c0 = arith.constant 0 : index
    %c0_0 = arith.constant 0 : index
    %0 = vector.load %arg2[%c0, %c0_0] : memref<16x32xbf16, #tpu.memory_space<vmem>>, vector<16x32xbf16>
    %c0_1 = arith.constant 0 : index
    %c0_2 = arith.constant 0 : index
    %1 = vector.load %arg3[%c0_1, %c0_2] : memref<32x128xbf16, #tpu.memory_space<vmem>>, vector<32x128xbf16>
    %cst = arith.constant dense<0.000000e+00> : vector<16x128xf32>
    %2 = tpu.matmul %0, %1, %cst {dimension_numbers = #tpu.dot_dimension_numbers<[1], [0], [0], [1], [0, 0, 1, 1], [], []>} : vector<16x32xbf16>, vector<32x128xbf16>, vector<16x128xf32> -> vector<16x128xf32>
    %c0_3 = arith.constant 0 : index
    %c0_4 = arith.constant 0 : index
    %3 = vector.load %arg4[%c0_3, %c0_4] : memref<1x128xf32, #tpu.memory_space<vmem>>, vector<1x128xf32>
    %4 = vector.broadcast %3 : vector<1x128xf32> to vector<16x128xf32>
    %5 = arith.addf %2, %4 : vector<16x128xf32>
    %c0_5 = arith.constant 0 : index
    %c0_6 = arith.constant 0 : index
    %6 = vector.load %arg5[%c0_5, %c0_6] : memref<16x128xf32, #tpu.memory_space<vmem>>, vector<16x128xf32>
    tpu.vector_store %arg5[%c0_5, %c0_6], %5 {strides = array<i32>} : memref<16x128xf32, #tpu.memory_space<vmem>>, vector<16x128xf32>,
    return
  }
  func.func @transform_0(%arg0: i32, %arg1: i32) -> (i32, i32) {
    %c0_i32 = arith.constant 0 : i32
    %c0_i32_0 = arith.constant 0 : i32
    return %arg1, %c0_i32 : i32, i32
  }
  func.func @transform_1(%arg0: i32, %arg1: i32) -> (i32, i32) {
    %c0_i32 = arith.constant 0 : i32
    %c0_i32_0 = arith.constant 0 : i32
    return %c0_i32, %arg0 : i32, i32
  }
  func.func @transform_2(%arg0: i32, %arg1: i32) -> (i32, i32) {
    %c0_i32 = arith.constant 0 : i32
    %c0_i32_0 = arith.constant 0 : i32
    return %c0_i32, %arg0 : i32, i32
  }
  func.func @transform_3(%arg0: i32, %arg1: i32) -> (i32, i32) {
    %c0_i32 = arith.constant 0 : i32
    return %arg1, %arg0 : i32, i32
  }
}

</mosaic_0001>

<llo_original>
// kernel: tpu_custom_call.1
$region0: #{tpu_custom_call.1}
  #allocation0 [shape = 'u32[]', space=smem, size = 0x4, offset = 0x4, fixed_abs, tag = 'smem constant byte address 0x4 - core index']
  #allocation1 [shape = 'u32[144,128]{1,0:T(1,128)}', space=vmem, size = 0x12000, scoped, tag = 'internal scratch']
  %s0 = inlined_call_operand.hbm [shape: bf16[16,32], index: 0, kind: input, shape index: {}]
  %s1 = inlined_call_operand.hbm [shape: bf16[32,128], index: 1, kind: input, shape index: {}]
  %s2 = inlined_call_operand.vmem [shape: f32[1,128], index: 2, kind: input, shape index: {}]
  %s3 = inlined_call_operand.hbm [shape: f32[16,128], index: 3, kind: output, shape index: {}]
  %s4 = sld [smem:[#allocation0]]
  $region30: #{tpu_custom_call.1} parent=0
    _
  %s6 = ssub.s32 1, %s4
  %s7 = scalar_select 0, %s6, %s4
  $region1: #{tpu_custom_call.1} parent=0
    #allocation2 [shape = 'u8[4096]{0}', space=vmem, size = 0x1000, scoped, tag = 'input window, operand 0, single buffered']
    #allocation3 [shape = 's32[1]{0}', space=sflag, size = 0x4, scoped, tag = 'scoped memory for tpu_custom_call.1']
    #allocation4 [shape = 's32[1]{0}', space=sflag, size = 0x4, scoped, tag = 'scoped memory for tpu_custom_call.1']
    #allocation5 [shape = 'u8[8192]{0}', space=vmem, size = 0x2000, scoped, tag = 'input window, operand 1, single buffered']
    #allocation6 [shape = 's32[1]{0}', space=sflag, size = 0x4, scoped, tag = 'scoped memory for tpu_custom_call.1']
    #allocation7 [shape = 'u8[8192]{0}', space=vmem, size = 0x2000, scoped, tag = 'output window, operand 0, single buffered']
    %8 = vsyncpa [#allocation3], 0
    %9 = vsyncpa [#allocation6], 0
    %10 = vsyncpa [#allocation4], 0
    // Predicated region
    $region2: #{tpu_custom_call.1} parent=1 // pred_check
      _
    $region3: #{tpu_custom_call.1} parent=1 // pred_check_branch
      %12 = sbr.rel (0) target = $region5
    $region4: #{tpu_custom_call.1} parent=1 // pred_region
      %s14 = ssub.s32 128, 128
      %15 = vsyncadd [#allocation3], %s14
      %s16 = sshll.u32 [#allocation2], 4
      %s17 = int_to_ptr.vmem [resolvable:$true] %s16
      %22 = dma.hbm_to_vmem [thread:$0]  %s0, 128, %s17, [#allocation3], 64, 64, 4
    $region5: #{tpu_custom_call.1} parent=1 // pred_fallthru
      _
    // Predicated region
    $region6: #{tpu_custom_call.1} parent=1 // pred_check
      _
    $region7: #{tpu_custom_call.1} parent=1 // pred_check_branch
      %24 = sbr.rel (0) target = $region9
    $region8: #{tpu_custom_call.1} parent=1 // pred_region
      %s26 = ssub.s32 256, 256
      %27 = vsyncadd [#allocation6], %s26
      %s28 = sshll.u32 [#allocation5], 4
      %s29 = int_to_ptr.vmem [resolvable:$true] %s28
      %34 = dma.hbm_to_vmem [thread:$0]  %s1, 256, %s29, [#allocation6], 64, 64, 4
    $region9: #{tpu_custom_call.1} parent=1 // pred_fallthru
      _
    // Predicated region
    $region10: #{tpu_custom_call.1} parent=1 // pred_check
      _
    $region11: #{tpu_custom_call.1} parent=1 // pred_check_branch
      %36 = sbr.rel (0) target = $region13
    $region12: #{tpu_custom_call.1} parent=1 // pred_region
      _
    $region13: #{tpu_custom_call.1} parent=1 // pred_fallthru
      _
    // Predicated region
    $region14: #{tpu_custom_call.1} parent=1 // pred_check
      _
    $region15: #{tpu_custom_call.1} parent=1 // pred_check_branch
      %38 = sbr.rel (0) target = $region17
    $region16: #{tpu_custom_call.1} parent=1 // pred_region
      %39 = dma.done [#allocation3], 128
    $region17: #{tpu_custom_call.1} parent=1 // pred_fallthru
      _
    // Predicated region
    $region18: #{tpu_custom_call.1} parent=1 // pred_check
      _
    $region19: #{tpu_custom_call.1} parent=1 // pred_check_branch
      %41 = sbr.rel (0) target = $region21
    $region20: #{tpu_custom_call.1} parent=1 // pred_region
      %42 = dma.done [#allocation6], 256
    $region21: #{tpu_custom_call.1} parent=1 // pred_fallthru
      _
    %v44 = vld [vmem:[#allocation2] sm:$0xf]
    %v45 = vld [vmem:[#allocation2 + $0x4] sm:$0xf]
    %v46 = vld [vmem:[#allocation5] sm:$0xf]
    %v47 = vld [vmem:[#allocation5 + $0x4] sm:$0xf]
    %v48 = vld [vmem:[#allocation5 + $0x8] sm:$0xf]
    %v49 = vld [vmem:[#allocation5 + $0xc] sm:$0xf]
    %v50 = vld [vmem:[%s2] sm:$0x1]
    %v52 = vlaneseq
    %v53 = vshrl.u32 %v52, 7
    %v54 = vsub.s32 0, %v53
    %v55 = vrot.slane %v50, %v54
    %v59 = vunpack.c.l.b16 %v44
    %v60 = vunpack.c.l.b16 %v45
    %v61 = vpack.c.b16 %v60, %v59
    %v66 = vunpack.c.l.b16 %v46
    %v67 = vunpack.c.l.b16 %v47
    %v68 = vunpack.c.l.b16 %v48
    %v69 = vunpack.c.l.b16 %v49
    %v70 = vpack.c.b16 %v67, %v66
    %v71 = vpack.c.b16 %v69, %v68
    %vm74 = vcmask 261120
    %v76 = vsel %vm74, %v61, 0
    %78 = vmatprep.subr.bf16.mxu0 0
    %79 = vmatpush1.bf16.msra.mxu0 %v70
    %80 = vmatprep.subr.bf16.mxu0 0
    %81 = vmatpush1.bf16.msra.mxu0 %v71
    %82 = vmatprep.subr.bf16.mxu0 0
    %83 = vmatpush1.bf16.msra.mxu0 0
    %84 = vmatprep.subr.bf16.mxu0 0
    %85 = vmatpush1.bf16.msra.mxu0 0
    %86 = vmatprep.subr.bf16.mxu0 0
    %87 = vmatpush1.bf16.msra.mxu0 0
    %88 = vmatprep.subr.bf16.mxu0 0
    %89 = vmatpush1.bf16.msra.mxu0 0
    %90 = vmatprep.subr.bf16.mxu0 0
    %91 = vmatpush1.bf16.msra.mxu0 0
    %92 = vmatprep.subr.bf16.mxu0 0
    %93 = vmatpush1.bf16.msra.mxu0 0
    %94 = vmatprep.subr.bf16.mxu0 0
    %95 = vmatpush1.bf16.msra.mxu0 0
    %96 = vmatprep.subr.bf16.mxu0 0
    %97 = vmatpush1.bf16.msra.mxu0 0
    %98 = vmatprep.subr.bf16.mxu0 0
    %99 = vmatpush1.bf16.msra.mxu0 0
    %100 = vmatprep.subr.bf16.mxu0 0
    %101 = vmatpush1.bf16.msra.mxu0 0
    %102 = vmatprep.subr.bf16.mxu0 0
    %103 = vmatpush1.bf16.msra.mxu0 0
    %104 = vmatprep.subr.bf16.mxu0 0
    %105 = vmatpush1.bf16.msra.mxu0 0
    %106 = vmatprep.subr.bf16.mxu0 0
    %107 = vmatpush1.bf16.msra.mxu0 0
    %108 = vmatprep.subr.bf16.mxu0 0
    %109 = vmatpush1.bf16.msra.mxu0 0
    %110 = vmatprep.mubr.bf16.mxu0 0
    %111 = vmatmul.mubr.bf16.gmra.mrb[0].mxu0 %v76
    %v112 = vpop.f32.mrb[0].mxu0
    %v113 = vadd.f32 %v55, %v112
    %v114 = vpop.f32.mrb[0].mxu0
    %v115 = vpop.f32.mrb[0].mxu0
    %v116 = vadd.f32 %v55, %v115
    %v117 = vpop.f32.mrb[0].mxu0
    %118 = vdwg.mxu0
    %119 = vst [vmem:[#allocation7] sm:$0xff] %v113
    %120 = vst [vmem:[#allocation7 + $0x8] sm:$0xff] %v116
    // Predicated region
    $region22: #{tpu_custom_call.1} parent=1 // pred_check
      _
    $region23: #{tpu_custom_call.1} parent=1 // pred_check_branch
      %122 = sbr.rel (0) target = $region25
    $region24: #{tpu_custom_call.1} parent=1 // pred_region
      %s124 = ssub.s32 256, 256
      %125 = vsyncadd [#allocation4], %s124
      %s126 = sshll.u32 [#allocation7], 4
      %s127 = int_to_ptr.vmem [resolvable:$true] %s126
      %132 = dma.vmem_to_hbm [thread:$0]  %s127, 256, %s3, [#allocation4], 128, 128, 8
    $region25: #{tpu_custom_call.1} parent=1 // pred_fallthru
      _
    // Predicated region
    $region26: #{tpu_custom_call.1} parent=1 // pred_check
      _
    $region27: #{tpu_custom_call.1} parent=1 // pred_check_branch
      %134 = sbr.rel (0) target = $region29
    $region28: #{tpu_custom_call.1} parent=1 // pred_region
      %135 = dma.done [#allocation4], 256
    $region29: #{tpu_custom_call.1} parent=1 // pred_fallthru
      _
    %136 = vsyncpa [#allocation3], 1
    %137 = vsyncpa [#allocation6], 1
    %138 = vsyncpa [#allocation4], 1

</llo_original>
